<compile_context>
chip_gen: v7x
topology: tpu7x:2x2x1
jax: 0.10.0
libtpu: 0.0.40
codegen_flags: <defaults>
</compile_context>

<pallas_src>
import functools

import jax
import jax.numpy as jnp
from jax.experimental import pallas as pl
from jax.experimental.pallas import tpu as pltpu


def _softmax_lastdim(x):
    m = jnp.max(x, axis=-1, keepdims=True)
    e = jnp.exp(x - m)
    return e / jnp.sum(e, axis=-1, keepdims=True)


def _fuse_elem_kernel(a_ref, b_ref, out_ref, *, fuse):
    a = a_ref[...].astype(jnp.float32)
    b = b_ref[...].astype(jnp.float32)
    if fuse == "ave":
        pred = (a + b) * 0.5
    elif fuse == "median":
        # torch.median over a size-2 axis keeps the lower value elementwise.
        pred = jnp.minimum(a, b)
    else:
        raise ValueError(f"unexpected elementwise fuse: {fuse}")
    out_ref[...] = pred.astype(out_ref.dtype)


def _fuse_train_kernel(w_ref, a_ref, b_ref, out_ref):
    a = a_ref[...].astype(jnp.float32)
    b = b_ref[...].astype(jnp.float32)
    out_ref[...] = (a * w_ref[0] + b * w_ref[1]).astype(out_ref.dtype)


def _fuse_smave_kernel(a_ref, b_ref, out_ref):
    a = a_ref[...].astype(jnp.float32)
    b = b_ref[...].astype(jnp.float32)
    pred = (_softmax_lastdim(a) + _softmax_lastdim(b)) * 0.5
    out_ref[...] = pred.astype(out_ref.dtype)


def _lane_dense_shape(B, n_class):
    """Factor the flat B*n_class buffer into (rows, width) with a 128-multiple
    width where possible (row-major reshape of a contiguous buffer is free)."""
    total = B * n_class
    best = None
    for width in (2048, 1024, 512, 256, 128):
        if total % width == 0:
            rows = total // width
            if rows >= 8:
                return rows, width
            if best is None:
                best = (rows, width)
    return best if best is not None else (B, n_class)


def _pick_tile_rows(rows, cols, itemsize, tile_bytes):
    """Byte-budgeted batch tile, aligned to the packed sublane group, with
    >=2 grid steps when the array is large enough (v7x megacore sharding)."""
    sub = 8 * max(1, 4 // itemsize)                 # f32: 8, bf16: 16, int8: 32
    row_bytes = max(1, cols * itemsize)
    tm = max(sub, (tile_bytes // row_bytes) // sub * sub)
    if rows >= 2 * sub:
        half = max(sub, (pl.cdiv(rows, 2) // sub) * sub)
        tm = min(tm, half)
    if tm >= rows:
        tm = rows                                   # full-extent block is legal
    return tm


def fuse_forward(pred_mri, pred_nonmri, *, fuse="ave", fuse_weight=None,
                 tile_bytes=4 * 1024 * 1024):
    """Forward pass of Fuse.

    pred_mri, pred_nonmri : [B, n_class] per-modality logits (any float dtype)
    fuse                  : 'train' | 'ave' | 'SMave' | 'median'
    fuse_weight           : dict {'MRI': w, 'NonMRI': w} (only for fuse='train')
    returns               : fused pred [B, n_class], same dtype as the inputs
    """
    if fuse not in ("train", "ave", "SMave", "median"):
        raise ValueError(f"Fuse method not supported: {fuse}")
    assert pred_mri.shape == pred_nonmri.shape
    assert pred_mri.dtype == pred_nonmri.dtype
    B, n_class = pred_mri.shape
    in_dtype = pred_mri.dtype
    itemsize = jnp.dtype(in_dtype).itemsize
    total = B * n_class

    elementwise = fuse in ("train", "ave", "median")
    if elementwise:
        # Lane-dense layout: purely elementwise, so any factorization of the
        # contiguous buffer is valid.
        rows, cols = _lane_dense_shape(B, n_class)
        a = pred_mri.reshape(rows, cols)
        b = pred_nonmri.reshape(rows, cols)
    else:
        # SMave needs the class axis intact for the per-modality softmax.
        rows, cols = B, n_class
        a, b = pred_mri, pred_nonmri

    tm = _pick_tile_rows(rows, cols, itemsize, tile_bytes)
    grid = (pl.cdiv(rows, tm),)
    row_spec = pl.BlockSpec((tm, cols), lambda i: (i, 0))

    # 3 operands x 2 pipeline buffers of (tm, cols) tiles, plus headroom.
    tile_in_bytes = tm * cols * itemsize
    vmem_limit = int(min(max(3 * 2 * tile_in_bytes + (4 << 20), 32 << 20), 48 << 20))

    flops = {"train": 3, "ave": 2, "median": 1, "SMave": 8}[fuse] * total
    cost = pl.CostEstimate(
        flops=flops,
        transcendentals=(2 * total) if fuse == "SMave" else 0,
        bytes_accessed=3 * total * itemsize + (8 if fuse == "train" else 0),
    )
    compiler_params = pltpu.CompilerParams(
        dimension_semantics=("parallel",),
        vmem_limit_bytes=vmem_limit,
    )
    out_shape = jax.ShapeDtypeStruct((rows, cols), in_dtype)

    if fuse == "train":
        if fuse_weight is None:
            raise ValueError("fuse='train' requires fuse_weight")
        w = jnp.asarray([fuse_weight["MRI"], fuse_weight["NonMRI"]],
                        dtype=jnp.float32)
        out = pl.pallas_call(
            _fuse_train_kernel,
            out_shape=out_shape,
            grid=grid,
            in_specs=[
                pl.BlockSpec(memory_space=pltpu.MemorySpace.SMEM),  # (2,) weights
                row_spec,                                           # pred_mri tile
                row_spec,                                           # pred_nonmri tile
            ],
            out_specs=row_spec,
            compiler_params=compiler_params,
            cost_estimate=cost,
        )(w, a, b)
    else:
        kernel = (_fuse_smave_kernel if fuse == "SMave"
                  else functools.partial(_fuse_elem_kernel, fuse=fuse))
        out = pl.pallas_call(
            kernel,
            out_shape=out_shape,
            grid=grid,
            in_specs=[row_spec, row_spec],
            out_specs=row_spec,
            compiler_params=compiler_params,
            cost_estimate=cost,
        )(a, b)

    return out.reshape(B, n_class)


def _reference_forward(pred_mri, pred_nonmri, fuse, fuse_weight=None):
    """Plain-JAX reference mirroring Fuse.predict."""
    a = pred_mri.astype(jnp.float32)
    b = pred_nonmri.astype(jnp.float32)
    if fuse == "train":
        out = a * fuse_weight["MRI"] + b * fuse_weight["NonMRI"]
    else:
        stacked = jnp.stack([a, b], axis=-1)
        if fuse == "ave":
            out = jnp.mean(stacked, axis=-1)
        elif fuse == "SMave":
            out = jnp.mean(jax.nn.softmax(stacked, axis=-2), axis=-1)
        elif fuse == "median":
            out = jnp.min(stacked, axis=-1)   # lower median of two values
        else:
            raise ValueError(fuse)
    return out.astype(pred_mri.dtype)


if __name__ == "__main__":
    key = jax.random.PRNGKey(0)
    k1, k2, k3 = jax.random.split(key, 3)

    # Synthetic 'train' fusion weights (Fuse.fusion needs host-side pandas metrics).
    w_m = float(jax.random.uniform(k3, ()))
    fuse_weight = {"MRI": w_m, "NonMRI": 1.0 - w_m}

    # (16, 10): flat size not 128-divisible -> fallback [B, n_class] layout,
    #           2 grid steps (exercises the pipelined path).
    # (64, 16): flat size 1024 -> lane-dense (8, 128) layout for the
    #           elementwise modes.
    for (B, n_class) in ((16, 10), (64, 16)):
        pred_mri = jax.random.normal(k1, (B, n_class), dtype=jnp.float32)
        pred_nonmri = jax.random.normal(k2, (B, n_class), dtype=jnp.float32)
        for fuse in ("ave", "SMave", "median", "train"):
            out = fuse_forward(pred_mri, pred_nonmri, fuse=fuse,
                               fuse_weight=fuse_weight)
            out = jax.block_until_ready(out)
            ref = _reference_forward(pred_mri, pred_nonmri, fuse, fuse_weight)
            assert out.shape == (B, n_class)
            assert out.dtype == pred_mri.dtype
            assert jnp.allclose(out, ref, atol=1e-5, rtol=1e-5), \
                f"mismatch: {fuse} {B}x{n_class}"

    # Narrow-dtype path: no wrapper casts, bf16 in -> bf16 out.
    pred_mri_bf = jax.random.normal(k1, (16, 10), dtype=jnp.bfloat16)
    pred_nonmri_bf = jax.random.normal(k2, (16, 10), dtype=jnp.bfloat16)
    for fuse in ("ave", "SMave", "median", "train"):
        out = fuse_forward(pred_mri_bf, pred_nonmri_bf, fuse=fuse,
                           fuse_weight=fuse_weight)
        out = jax.block_until_ready(out)
        ref = _reference_forward(pred_mri_bf, pred_nonmri_bf, fuse, fuse_weight)
        assert out.dtype == jnp.bfloat16
        assert jnp.allclose(out.astype(jnp.float32), ref.astype(jnp.float32),
                            atol=2e-2, rtol=2e-2), f"bf16 mismatch: {fuse}"

    print("KERNEL_OK")
</pallas_src>

<mosaic_0001>
module attributes {stable_mosaic.version = 11 : i64} {
  func.func @_fuse_elem_kernel(%arg0: i32, %arg1: memref<8x10xf32, #tpu.memory_space<vmem>>, %arg2: memref<8x10xf32, #tpu.memory_space<vmem>>, %arg3: memref<8x10xf32, #tpu.memory_space<vmem>>) attributes {dimension_semantics = [#tpu.dimension_semantics<parallel>], iteration_bounds = array<i64: 2>, scalar_prefetch = 0 : i64, scratch_operands = 0 : i64, tpu.core_type = #tpu.core_type<tc>, window_params = [{transform_indices = @transform_0, window_bounds = array<i64: 8, 10>}, {transform_indices = @transform_1, window_bounds = array<i64: 8, 10>}, {transform_indices = @transform_2, window_bounds = array<i64: 8, 10>}]} {
    %c0 = arith.constant 0 : index
    %c0_0 = arith.constant 0 : index
    %0 = vector.load %arg1[%c0, %c0_0] : memref<8x10xf32, #tpu.memory_space<vmem>>, vector<8x10xf32>
    %c0_1 = arith.constant 0 : index
    %c0_2 = arith.constant 0 : index
    %1 = vector.load %arg2[%c0_1, %c0_2] : memref<8x10xf32, #tpu.memory_space<vmem>>, vector<8x10xf32>
    %2 = arith.addf %0, %1 : vector<8x10xf32>
    %cst = arith.constant 5.000000e-01 : f32
    %3 = vector.broadcast %cst : f32 to vector<8x10xf32>
    %4 = arith.mulf %2, %3 : vector<8x10xf32>
    %c0_3 = arith.constant 0 : index
    %c0_4 = arith.constant 0 : index
    %5 = vector.load %arg3[%c0_3, %c0_4] : memref<8x10xf32, #tpu.memory_space<vmem>>, vector<8x10xf32>
    tpu.vector_store %arg3[%c0_3, %c0_4], %4 {strides = array<i32>} : memref<8x10xf32, #tpu.memory_space<vmem>>, vector<8x10xf32>,
    return
  }
  func.func @transform_0(%arg0: i32) -> (i32, i32) {
    %c0_i32 = arith.constant 0 : i32
    %c0_i32_0 = arith.constant 0 : i32
    return %arg0, %c0_i32 : i32, i32
  }
  func.func @transform_1(%arg0: i32) -> (i32, i32) {
    %c0_i32 = arith.constant 0 : i32
    %c0_i32_0 = arith.constant 0 : i32
    return %arg0, %c0_i32 : i32, i32
  }
  func.func @transform_2(%arg0: i32) -> (i32, i32) {
    %c0_i32 = arith.constant 0 : i32
    %c0_i32_0 = arith.constant 0 : i32
    return %arg0, %c0_i32 : i32, i32
  }
}

</mosaic_0001>

<llo_original>
// kernel: tpu_custom_call.1
$region0: #{tpu_custom_call.1}
  #allocation0 [shape = 'u32[]', space=smem, size = 0x4, offset = 0x4, fixed_abs, tag = 'smem constant byte address 0x4 - core index']
  #allocation1 [shape = 'u32[144,128]{1,0:T(1,128)}', space=vmem, size = 0x12000, scoped, tag = 'internal scratch']
  %s0 = inlined_call_operand.hbm [shape: f32[16,10], index: 0, kind: input, shape index: {}]
  %s1 = inlined_call_operand.hbm [shape: f32[16,10], index: 1, kind: input, shape index: {}]
  %s2 = inlined_call_operand.hbm [shape: f32[16,10], index: 2, kind: output, shape index: {}]
  %s3 = sld [smem:[#allocation0]]
  $region49: #{tpu_custom_call.1} parent=0
    _
  %s5 = ssub.s32 1, %s3
  %s6 = scalar_select 0, %s5, %s3
  $region1: #{tpu_custom_call.1} parent=0
    #allocation2 [shape = 'u8[8192]{0}', space=vmem, size = 0x2000, scoped, tag = 'input window, operand 0']
    #allocation3 [shape = 's32[2]{0}', space=sflag, size = 0x8, scoped, tag = 'scoped memory for tpu_custom_call.1']
    #allocation4 [shape = 's32[2]{0}', space=sflag, size = 0x8, scoped, tag = 'scoped memory for tpu_custom_call.1']
    #allocation5 [shape = 'u8[8192]{0}', space=vmem, size = 0x2000, scoped, tag = 'input window, operand 1']
    #allocation6 [shape = 's32[2]{0}', space=sflag, size = 0x8, scoped, tag = 'scoped memory for tpu_custom_call.1']
    #allocation7 [shape = 'u8[8192]{0}', space=vmem, size = 0x2000, scoped, tag = 'output window, operand 0']
    %7 = vsyncpa [#allocation3], 0
    %s8 = scalar_lea.sflag [#allocation3], 1
    %9 = vsyncpa %s8, 0
    %10 = vsyncpa [#allocation6], 0
    %s11 = scalar_lea.sflag [#allocation6], 1
    %12 = vsyncpa %s11, 0
    %13 = vsyncpa [#allocation4], 0
    %s14 = scalar_lea.sflag [#allocation4], 1
    %15 = vsyncpa %s14, 0
    loop: start=0, step=1, limit=4
    $region2: #{tpu_custom_call.1} parent=1 // loop_pre_header
      _
    $region3: #{tpu_custom_call.1} parent=1 // loop_header
      %s17 = sphi 0, %s21
      %p18 = scmp.ge.s32.totalorder %s17, 4
      %s27 = sphi 0, %s29
      %s30 = sphi 0, %s27
      %s31 = sphi 0, %s30
      %s47 = sphi 0, %s31
      %s53 = sphi 0, %s55
      %s56 = sphi 0, %s53
      %s57 = sphi 0, %s56
      %s73 = sphi 0, %s57
      %s79 = sphi 0, %s81
      %s82 = sphi 0, %s79
      %s83 = sphi 0, %s82
      %s99 = sphi 0, %s83
    $region4: #{tpu_custom_call.1} parent=1 // loop_header_branch
      %20 = sbr.rel (%p18) target = $region8
    $region5: #{tpu_custom_call.1} parent=1 // loop_body
      %s22 = ssub.s32 %s17, 1
      %s23 = ssub.s32 %s17, 2
      %s24 = sadd.s32 %s17, 1
      %s25 = ssub.s32 %s17, %s24
      %p26 = scmp.eq.s32.totalorder %s25, 0
      %s28 = sadd.s32 %s27, 1
      %s29 = scalar_select %p26, %s27, %s28
      %p32 = pneg %p26
      %p33 = scmp.eq.s32.totalorder %s17, 1
      %p34 = por %p32, %p33
      %p35 = scmp.ne.s32.totalorder %s27, %s30
      %p36 = scmp.eq.s32.totalorder %s17, 0
      %p37 = por %p35, %p36
      %p38 = scmp.ne.s32.totalorder %s27, %s30
      %p39 = scmp.eq.s32.totalorder %s22, 1
      %p40 = por %p38, %p39
      %p41 = scmp.ne.s32.totalorder %s30, %s31
      %p42 = scmp.eq.s32.totalorder %s22, 0
      %p43 = por %p41, %p42
      %p44 = scmp.ne.s32.totalorder %s30, %s31
      %p45 = scmp.eq.s32.totalorder %s23, 1
      %p46 = por %p44, %p45
      %p48 = scmp.ne.s32.totalorder %s31, %s47
      %p49 = scmp.eq.s32.totalorder %s23, 0
      %p50 = por %p48, %p49
      %s51 = ssub.s32 %s17, %s24
      %p52 = scmp.eq.s32.totalorder %s51, 0
      %s54 = sadd.s32 %s53, 1
      %s55 = scalar_select %p52, %s53, %s54
      %p58 = pneg %p52
      %p59 = scmp.eq.s32.totalorder %s17, 1
      %p60 = por %p58, %p59
      %p61 = scmp.ne.s32.totalorder %s53, %s56
      %p62 = scmp.eq.s32.totalorder %s17, 0
      %p63 = por %p61, %p62
      %p64 = scmp.ne.s32.totalorder %s53, %s56
      %p65 = scmp.eq.s32.totalorder %s22, 1
      %p66 = por %p64, %p65
      %p67 = scmp.ne.s32.totalorder %s56, %s57
      %p68 = scmp.eq.s32.totalorder %s22, 0
      %p69 = por %p67, %p68
      %p70 = scmp.ne.s32.totalorder %s56, %s57
      %p71 = scmp.eq.s32.totalorder %s23, 1
      %p72 = por %p70, %p71
      %p74 = scmp.ne.s32.totalorder %s57, %s73
      %p75 = scmp.eq.s32.totalorder %s23, 0
      %p76 = por %p74, %p75
      %s77 = ssub.s32 %s17, %s24
      %p78 = scmp.eq.s32.totalorder %s77, 0
      %s80 = sadd.s32 %s79, 1
      %s81 = scalar_select %p78, %s79, %s80
      %p84 = pneg %p78
      %p85 = scmp.eq.s32.totalorder %s17, 1
      %p86 = por %p84, %p85
      %p87 = scmp.ne.s32.totalorder %s79, %s82
      %p88 = scmp.eq.s32.totalorder %s17, 0
      %p89 = por %p87, %p88
      %p90 = scmp.ne.s32.totalorder %s79, %s82
      %p91 = scmp.eq.s32.totalorder %s22, 1
      %p92 = por %p90, %p91
      %p93 = scmp.ne.s32.totalorder %s82, %s83
      %p94 = scmp.eq.s32.totalorder %s22, 0
      %p95 = por %p93, %p94
      %p96 = scmp.ne.s32.totalorder %s82, %s83
      %p97 = scmp.eq.s32.totalorder %s23, 1
      %p98 = por %p96, %p97
      %p100 = scmp.ne.s32.totalorder %s83, %s99
      %p101 = scmp.eq.s32.totalorder %s23, 0
      %p102 = por %p100, %p101
      %p103 = scmp.le.s32.totalorder 1, %s17
      %p104 = scmp.lt.s32.totalorder %s17, 3
      %p105 = pnand %p103, %p104
      %p106 = pneg %p105
      // Predicated region
      $region9: #{tpu_custom_call.1} parent=5 // pred_check
        _
      $region10: #{tpu_custom_call.1} parent=5 // pred_check_branch
        %108 = sbr.rel (%p105) target = $region12
      $region11: #{tpu_custom_call.1} parent=5 // pred_region
        %s109 = ssub.s32 %s17, 1
      $region12: #{tpu_custom_call.1} parent=5 // pred_fallthru
        _
      %p110 = scmp.lt.s32.totalorder %s17, 2
      // Predicated region
      $region13: #{tpu_custom_call.1} parent=5 // pred_check
        %p111 = pneg %p110
      $region14: #{tpu_custom_call.1} parent=5 // pred_check_branch
        %113 = sbr.rel (%p111) target = $region16
      $region15: #{tpu_custom_call.1} parent=5 // pred_region
        // Predicated region
        $region17: #{tpu_custom_call.1} parent=15 // pred_check
          %p114 = pneg %p37
        $region18: #{tpu_custom_call.1} parent=15 // pred_check_branch
          %116 = sbr.rel (%p114) target = $region20
        $region19: #{tpu_custom_call.1} parent=15 // pred_region
          %s117 = sand.u32 %s27, 1
          %s118 = scalar_lea.sflag [#allocation3], %s117
          %s119 = sand.u32 %s27, 1
          %s120 = smul.addr %s119, 8
          %s121 = scalar_lea.vmem [#allocation2], %s120
          %s123 = ssub.s32 128, 128
          %124 = vsyncadd %s118, %s123
          %s125 = smul.addr %s17, 128
          %s126 = scalar_lea.hbm %s0, %s125
          %s128 = sshll.u32 %s121, 4
          %s129 = int_to_ptr.vmem [resolvable:$true] %s128
          %131 = dma.hbm_to_vmem [thread:$0]  %s126, 128, %s129, %s118
        $region20: #{tpu_custom_call.1} parent=15 // pred_fallthru
          _
        // Predicated region
        $region21: #{tpu_custom_call.1} parent=15 // pred_check
          %p132 = pneg %p63
        $region22: #{tpu_custom_call.1} parent=15 // pred_check_branch
          %134 = sbr.rel (%p132) target = $region24
        $region23: #{tpu_custom_call.1} parent=15 // pred_region
          %s135 = sand.u32 %s53, 1
          %s136 = scalar_lea.sflag [#allocation6], %s135
          %s137 = sand.u32 %s53, 1
          %s138 = smul.addr %s137, 8
          %s139 = scalar_lea.vmem [#allocation5], %s138
          %s141 = ssub.s32 128, 128
          %142 = vsyncadd %s136, %s141
          %s143 = smul.addr %s17, 128
          %s144 = scalar_lea.hbm %s1, %s143
          %s146 = sshll.u32 %s139, 4
          %s147 = int_to_ptr.vmem [resolvable:$true] %s146
          %149 = dma.hbm_to_vmem [thread:$0]  %s144, 128, %s147, %s136
        $region24: #{tpu_custom_call.1} parent=15 // pred_fallthru
          _
      $region16: #{tpu_custom_call.1} parent=5 // pred_fallthru
        _
      %p150 = scmp.le.s32.totalorder 1, %s17
      %p151 = scmp.lt.s32.totalorder %s17, 3
      %p152 = pnand %p150, %p151
      %p153 = pneg %p152
      // Predicated region
      $region25: #{tpu_custom_call.1} parent=5 // pred_check
        _
      $region26: #{tpu_custom_call.1} parent=5 // pred_check_branch
        %155 = sbr.rel (%p152) target = $region28
      $region27: #{tpu_custom_call.1} parent=5 // pred_region
        %s156 = ssub.s32 %s17, 1
        %s157 = sand.u32 %s30, 1
        %s158 = scalar_lea.sflag [#allocation3], %s157
        %s159 = sand.u32 %s30, 1
        %s160 = smul.addr %s159, 8
        %s161 = scalar_lea.vmem [#allocation2], %s160
        // Predicated region
        $region29: #{tpu_custom_call.1} parent=27 // pred_check
          %p162 = pneg %p43
        $region30: #{tpu_custom_call.1} parent=27 // pred_check_branch
          %164 = sbr.rel (%p162) target = $region32
        $region31: #{tpu_custom_call.1} parent=27 // pred_region
          %165 = dma.done %s158, 128
        $region32: #{tpu_custom_call.1} parent=27 // pred_fallthru
          _
        %s166 = sand.u32 %s56, 1
        %s167 = scalar_lea.sflag [#allocation6], %s166
        %s168 = sand.u32 %s56, 1
        %s169 = smul.addr %s168, 8
        %s170 = scalar_lea.vmem [#allocation5], %s169
        // Predicated region
        $region33: #{tpu_custom_call.1} parent=27 // pred_check
          %p171 = pneg %p69
        $region34: #{tpu_custom_call.1} parent=27 // pred_check_branch
          %173 = sbr.rel (%p171) target = $region36
        $region35: #{tpu_custom_call.1} parent=27 // pred_region
          %174 = dma.done %s167, 128
        $region36: #{tpu_custom_call.1} parent=27 // pred_fallthru
          _
        %s175 = sand.u32 %s30, 1
        %s176 = scalar_lea.sflag [#allocation3], %s175
        %s177 = sand.u32 %s30, 1
        %s178 = smul.addr %s177, 8
        %s179 = scalar_lea.vmem [#allocation2], %s178
        %p180 = pneg %p43
        %p181 = pneg %p40
        %s182 = sand.u32 %s56, 1
        %s183 = scalar_lea.sflag [#allocation6], %s182
        %s184 = sand.u32 %s56, 1
        %s185 = smul.addr %s184, 8
        %s186 = scalar_lea.vmem [#allocation5], %s185
        %p187 = pneg %p69
        %p188 = pneg %p66
        %p189 = pneg %p95
        %p190 = pneg %p92
        %s191 = sand.u32 %s82, 1
        %s192 = scalar_lea.sflag [#allocation4], %s191
        %s193 = sand.u32 %s82, 1
        %s194 = smul.addr %s193, 8
        %s195 = scalar_lea.vmem [#allocation7], %s194
        %v196 = vld [vmem:[%s161] sm:$0xff]
        %v197 = vld [vmem:[%s170] sm:$0xff]
        %v198 = vadd.f32 %v196, %v197
        %v199 = vmul.f32 %v198, 0.5
        %vm200 = vcmask 80896
        %201 = vst.msk [vmem:[%s195] sm:$0xff] %vm200, %v199
        %s202 = sand.u32 %s82, 1
        %s203 = scalar_lea.sflag [#allocation4], %s202
        %s204 = sand.u32 %s82, 1
        %s205 = smul.addr %s204, 8
        %s206 = scalar_lea.vmem [#allocation7], %s205
        // Predicated region
        $region37: #{tpu_custom_call.1} parent=27 // pred_check
          %p207 = pneg %p92
        $region38: #{tpu_custom_call.1} parent=27 // pred_check_branch
          %209 = sbr.rel (%p207) target = $region40
        $region39: #{tpu_custom_call.1} parent=27 // pred_region
          %s211 = ssub.s32 128, 128
          %212 = vsyncadd %s203, %s211
          %s213 = smul.addr %s22, 128
          %s214 = scalar_lea.hbm %s2, %s213
          %s216 = sshll.u32 %s206, 4
          %s217 = int_to_ptr.vmem [resolvable:$true] %s216
          %219 = dma.vmem_to_hbm [thread:$0]  %s217, 128, %s214, %s203
        $region40: #{tpu_custom_call.1} parent=27 // pred_fallthru
          _
      $region28: #{tpu_custom_call.1} parent=5 // pred_fallthru
        _
      %p220 = scmp.le.s32.totalorder 2, %s17
      // Predicated region
      $region41: #{tpu_custom_call.1} parent=5 // pred_check
        %p221 = pneg %p220
      $region42: #{tpu_custom_call.1} parent=5 // pred_check_branch
        %223 = sbr.rel (%p221) target = $region44
      $region43: #{tpu_custom_call.1} parent=5 // pred_region
        %s224 = ssub.s32 %s17, 2
        // Predicated region
        $region45: #{tpu_custom_call.1} parent=43 // pred_check
          %p225 = pneg %p98
        $region46: #{tpu_custom_call.1} parent=43 // pred_check_branch
          %227 = sbr.rel (%p225) target = $region48
        $region47: #{tpu_custom_call.1} parent=43 // pred_region
          %s228 = sand.u32 %s83, 1
          %s229 = scalar_lea.sflag [#allocation4], %s228
          %s230 = sand.u32 %s83, 1
          %s231 = smul.addr %s230, 8
          %s232 = scalar_lea.vmem [#allocation7], %s231
          %233 = dma.done %s229, 128
        $region48: #{tpu_custom_call.1} parent=43 // pred_fallthru
          _
      $region44: #{tpu_custom_call.1} parent=5 // pred_fallthru
        _
    $region6: #{tpu_custom_call.1} parent=1 // loop_footer
      %s21 = sadd.s32 1, %s17
    $region7: #{tpu_custom_call.1} parent=1 // loop_footer_branch
      %16 = sbr.rel target = $region3
    $region8: #{tpu_custom_call.1} parent=1 // loop_exit
      _
    %234 = vsyncpa [#allocation3], 1
    %s235 = scalar_lea.sflag [#allocation3], 1
    %236 = vsyncpa %s235, 1
    %237 = vsyncpa [#allocation6], 1
    %s238 = scalar_lea.sflag [#allocation6], 1
    %239 = vsyncpa %s238, 1
    %240 = vsyncpa [#allocation4], 1
    %s241 = scalar_lea.sflag [#allocation4], 1
    %242 = vsyncpa %s241, 1

</llo_original>
